<compile_context>
chip_gen: v7x
topology: tpu7x:2x2x1
jax: 0.10.0
libtpu: 0.0.40
codegen_flags: <defaults>
</compile_context>

<pallas_src>
import jax
import jax.numpy as jnp
from jax.experimental import pallas as pl
from jax.experimental.pallas import tpu as pltpu


# -----------------------------------------------------------------------------
# Fused kernel: synthetic iterative model recurrence + IterativeMask head.
# -----------------------------------------------------------------------------
def _iterative_mask_kernel(x_ref, w12_ref, par_ref, bh_ref, o_ref):
    # x_ref   : [S*B, 2H]  bf16, s-major rows (row index = t*B + b)
    # w12_ref : [2H, Hout] bf16, stacked [w1; w2]
    # par_ref : [Hout+16, Hout] f32 packed params:
    #             rows [0:Hout]        -> u
    #             row  Hout            -> b_model
    #             row  Hout + 8        -> w_head
    # bh_ref  : [1] f32 scalar head bias (SMEM)
    # o_ref   : [B, 1] f32
    SB, _ = x_ref.shape
    B = o_ref.shape[0]
    S = SB // B
    Hout = par_ref.shape[1]

    # ---- single fused input-projection GEMM over all S steps (bf16 MXU) -----
    p = jnp.dot(x_ref[...], w12_ref[...],
                preferred_element_type=jnp.float32)          # (S*B, Hout) f32

    # Fold the model bias in once, off the serial chain.
    b = par_ref[Hout:Hout + 1, :]                            # (1, Hout)
    p = p + b

    u = par_ref[0:Hout, :]                                   # (Hout, Hout) f32

    # ---- serial recurrence: one tiny Hout x Hout matmul per step ------------
    # S is static & small -> fully unrolled at trace time; p slices are static
    # contiguous sublane windows thanks to the s-major layout.
    h = jnp.zeros((B, Hout), dtype=jnp.float32)
    for t in range(S):
        pre = p[t * B:(t + 1) * B, :] + jnp.dot(
            h, u, preferred_element_type=jnp.float32)
        h = jnp.where(pre >= 0, pre, 0.01 * pre)             # leaky_relu(0.01)

    # ---- fused head: y = h @ W^T + b as VPU mul + lane reduction ------------
    w_head = par_ref[Hout + 8:Hout + 9, :]                   # (1, Hout)
    y = jnp.sum(h * w_head, axis=-1, keepdims=True) + bh_ref[0]
    o_ref[...] = y.astype(o_ref.dtype)


def iterative_mask_forward(I1, I2, params):
    """IterativeMask.forward: returns W(model(I1, I2)[0][-1]) of shape [B, 1]."""
    B, S, H = I1.shape
    Hout = params["w1"].shape[1]

    # Fuse the two projections: concat features, stack weights; s-major rows.
    I12 = jnp.concatenate([I1, I2], axis=-1)                 # [B, S, 2H]
    I12 = jnp.transpose(I12, (1, 0, 2)).reshape(S * B, 2 * H)
    I12 = I12.astype(jnp.bfloat16)
    w12 = jnp.concatenate([params["w1"], params["w2"]],
                          axis=0).astype(jnp.bfloat16)       # [2H, Hout]

    # Pack the remaining small f32 params into one array (8-aligned rows).
    pack = jnp.zeros((Hout + 16, Hout), jnp.float32)
    pack = pack.at[:Hout, :].set(params["u"])
    pack = pack.at[Hout, :].set(params["b_model"])
    pack = pack.at[Hout + 8, :].set(params["w_head"][0])

    vmem = pl.BlockSpec(memory_space=pltpu.MemorySpace.VMEM)
    smem = pl.BlockSpec(memory_space=pltpu.MemorySpace.SMEM)

    return pl.pallas_call(
        _iterative_mask_kernel,
        out_shape=jax.ShapeDtypeStruct((B, 1), jnp.float32),
        in_specs=[
            vmem,   # I12  [S*B, 2H] bf16
            vmem,   # w12  [2H, Hout] bf16
            vmem,   # packed params [Hout+16, Hout] f32
            smem,   # b_head [1] scalar
        ],
        out_specs=pl.BlockSpec(memory_space=pltpu.MemorySpace.VMEM),
    )(I12, w12, pack, params["b_head"])


# -----------------------------------------------------------------------------
# Pure-JAX f32 reference for sanity checking.
# -----------------------------------------------------------------------------
def _reference(I1, I2, params):
    B, S, H = I1.shape
    h = jnp.zeros((B, params["w1"].shape[1]), jnp.float32)
    for t in range(S):
        pre = (I1[:, t] @ params["w1"] + I2[:, t] @ params["w2"]
               + h @ params["u"] + params["b_model"][None, :])
        h = jnp.where(pre >= 0, pre, 0.01 * pre)
    return h @ params["w_head"].T + params["b_head"][None, :]


if __name__ == "__main__":
    B, S, H, HOUT = 2, 8, 32, 32   # model.output_size = HOUT

    key = jax.random.PRNGKey(0)
    k_i1, k_i2, k_w1, k_w2, k_u, k_wh = jax.random.split(key, 6)

    I1 = jax.random.normal(k_i1, (B, S, H), dtype=jnp.float32)
    I2 = jax.random.normal(k_i2, (B, S, H), dtype=jnp.float32)

    params = {
        "w1": jax.random.normal(k_w1, (H, HOUT), dtype=jnp.float32) * 0.1,
        "w2": jax.random.normal(k_w2, (H, HOUT), dtype=jnp.float32) * 0.1,
        "u": jax.random.normal(k_u, (HOUT, HOUT), dtype=jnp.float32) * 0.1,
        "b_model": jnp.full((HOUT,), 0.01, dtype=jnp.float32),
        # W = nn.Linear(model.output_size, 1): weight [1, HOUT], bias [1]
        "w_head": jax.random.normal(k_wh, (1, HOUT), dtype=jnp.float32) * 0.1,
        "b_head": jnp.full((1,), 0.02, dtype=jnp.float32),
    }

    out = jax.block_until_ready(iterative_mask_forward(I1, I2, params))
    ref = _reference(I1, I2, params)

    assert out.shape == (B, 1), out.shape
    # Tolerance relaxed (vs f32 reference) for the bf16 input projection.
    assert jnp.allclose(out, ref, atol=2e-2, rtol=2e-2), (out, ref)

    print("KERNEL_OK")
</pallas_src>

<mosaic_0001>
module attributes {stable_mosaic.version = 11 : i64} {
  func.func @_iterative_mask_kernel(%arg0: memref<16x64xbf16, #tpu.memory_space<vmem>>, %arg1: memref<64x32xbf16, #tpu.memory_space<vmem>>, %arg2: memref<48x32xf32, #tpu.memory_space<vmem>>, %arg3: memref<1xf32, #tpu.memory_space<smem>>, %arg4: memref<2x1xf32, #tpu.memory_space<vmem>>) attributes {dimension_semantics = [], scalar_prefetch = 0 : i64, scratch_operands = 0 : i64, tpu.core_type = #tpu.core_type<tc>} {
    %c0 = arith.constant 0 : index
    %c0_0 = arith.constant 0 : index
    %0 = vector.load %arg0[%c0, %c0_0] : memref<16x64xbf16, #tpu.memory_space<vmem>>, vector<16x64xbf16>
    %c0_1 = arith.constant 0 : index
    %c0_2 = arith.constant 0 : index
    %1 = vector.load %arg1[%c0_1, %c0_2] : memref<64x32xbf16, #tpu.memory_space<vmem>>, vector<64x32xbf16>
    %cst = arith.constant dense<0.000000e+00> : vector<16x32xf32>
    %2 = tpu.matmul %0, %1, %cst {dimension_numbers = #tpu.dot_dimension_numbers<[1], [0], [0], [1], [0, 0, 1, 1], [], []>} : vector<16x64xbf16>, vector<64x32xbf16>, vector<16x32xf32> -> vector<16x32xf32>
    %c32 = arith.constant 32 : index
    %c0_3 = arith.constant 0 : index
    %3 = vector.load %arg2[%c32, %c0_3] : memref<48x32xf32, #tpu.memory_space<vmem>>, vector<1x32xf32>
    %4 = vector.broadcast %3 : vector<1x32xf32> to vector<16x32xf32>
    %5 = arith.addf %2, %4 : vector<16x32xf32>
    %c0_4 = arith.constant 0 : index
    %c0_5 = arith.constant 0 : index
    %6 = vector.load %arg2[%c0_4, %c0_5] : memref<48x32xf32, #tpu.memory_space<vmem>>, vector<32x32xf32>
    %cst_6 = arith.constant 0.000000e+00 : f32
    %7 = vector.broadcast %cst_6 : f32 to vector<2x32xf32>
    %8 = vector.extract_strided_slice %5 {offsets = [0, 0], sizes = [2, 32], strides = [1, 1]} : vector<16x32xf32> to vector<2x32xf32>
    %cst_7 = arith.constant dense<0.000000e+00> : vector<2x32xf32>
    %9 = tpu.matmul %7, %6, %cst_7 {dimension_numbers = #tpu.dot_dimension_numbers<[1], [0], [0], [1], [0, 0, 1, 1], [], []>} : vector<2x32xf32>, vector<32x32xf32>, vector<2x32xf32> -> vector<2x32xf32>
    %10 = arith.addf %8, %9 : vector<2x32xf32>
    %cst_8 = arith.constant 0.000000e+00 : f32
    %11 = vector.broadcast %cst_8 : f32 to vector<2x32xf32>
    %12 = arith.cmpf oge, %10, %11 : vector<2x32xf32>
    %cst_9 = arith.constant 0.00999999977 : f32
    %13 = vector.broadcast %cst_9 : f32 to vector<2x32xf32>
    %14 = arith.mulf %13, %10 : vector<2x32xf32>
    %15 = arith.select %12, %10, %14 : vector<2x32xi1>, vector<2x32xf32>
    %16 = vector.extract_strided_slice %5 {offsets = [2, 0], sizes = [2, 32], strides = [1, 1]} : vector<16x32xf32> to vector<2x32xf32>
    %cst_10 = arith.constant dense<0.000000e+00> : vector<2x32xf32>
    %17 = tpu.matmul %15, %6, %cst_10 {dimension_numbers = #tpu.dot_dimension_numbers<[1], [0], [0], [1], [0, 0, 1, 1], [], []>} : vector<2x32xf32>, vector<32x32xf32>, vector<2x32xf32> -> vector<2x32xf32>
    %18 = arith.addf %16, %17 : vector<2x32xf32>
    %cst_11 = arith.constant 0.000000e+00 : f32
    %19 = vector.broadcast %cst_11 : f32 to vector<2x32xf32>
    %20 = arith.cmpf oge, %18, %19 : vector<2x32xf32>
    %cst_12 = arith.constant 0.00999999977 : f32
    %21 = vector.broadcast %cst_12 : f32 to vector<2x32xf32>
    %22 = arith.mulf %21, %18 : vector<2x32xf32>
    %23 = arith.select %20, %18, %22 : vector<2x32xi1>, vector<2x32xf32>
    %24 = vector.extract_strided_slice %5 {offsets = [4, 0], sizes = [2, 32], strides = [1, 1]} : vector<16x32xf32> to vector<2x32xf32>
    %cst_13 = arith.constant dense<0.000000e+00> : vector<2x32xf32>
    %25 = tpu.matmul %23, %6, %cst_13 {dimension_numbers = #tpu.dot_dimension_numbers<[1], [0], [0], [1], [0, 0, 1, 1], [], []>} : vector<2x32xf32>, vector<32x32xf32>, vector<2x32xf32> -> vector<2x32xf32>
    %26 = arith.addf %24, %25 : vector<2x32xf32>
    %cst_14 = arith.constant 0.000000e+00 : f32
    %27 = vector.broadcast %cst_14 : f32 to vector<2x32xf32>
    %28 = arith.cmpf oge, %26, %27 : vector<2x32xf32>
    %cst_15 = arith.constant 0.00999999977 : f32
    %29 = vector.broadcast %cst_15 : f32 to vector<2x32xf32>
    %30 = arith.mulf %29, %26 : vector<2x32xf32>
    %31 = arith.select %28, %26, %30 : vector<2x32xi1>, vector<2x32xf32>
    %32 = vector.extract_strided_slice %5 {offsets = [6, 0], sizes = [2, 32], strides = [1, 1]} : vector<16x32xf32> to vector<2x32xf32>
    %cst_16 = arith.constant dense<0.000000e+00> : vector<2x32xf32>
    %33 = tpu.matmul %31, %6, %cst_16 {dimension_numbers = #tpu.dot_dimension_numbers<[1], [0], [0], [1], [0, 0, 1, 1], [], []>} : vector<2x32xf32>, vector<32x32xf32>, vector<2x32xf32> -> vector<2x32xf32>
    %34 = arith.addf %32, %33 : vector<2x32xf32>
    %cst_17 = arith.constant 0.000000e+00 : f32
    %35 = vector.broadcast %cst_17 : f32 to vector<2x32xf32>
    %36 = arith.cmpf oge, %34, %35 : vector<2x32xf32>
    %cst_18 = arith.constant 0.00999999977 : f32
    %37 = vector.broadcast %cst_18 : f32 to vector<2x32xf32>
    %38 = arith.mulf %37, %34 : vector<2x32xf32>
    %39 = arith.select %36, %34, %38 : vector<2x32xi1>, vector<2x32xf32>
    %40 = vector.extract_strided_slice %5 {offsets = [8, 0], sizes = [2, 32], strides = [1, 1]} : vector<16x32xf32> to vector<2x32xf32>
    %cst_19 = arith.constant dense<0.000000e+00> : vector<2x32xf32>
    %41 = tpu.matmul %39, %6, %cst_19 {dimension_numbers = #tpu.dot_dimension_numbers<[1], [0], [0], [1], [0, 0, 1, 1], [], []>} : vector<2x32xf32>, vector<32x32xf32>, vector<2x32xf32> -> vector<2x32xf32>
    %42 = arith.addf %40, %41 : vector<2x32xf32>
    %cst_20 = arith.constant 0.000000e+00 : f32
    %43 = vector.broadcast %cst_20 : f32 to vector<2x32xf32>
    %44 = arith.cmpf oge, %42, %43 : vector<2x32xf32>
    %cst_21 = arith.constant 0.00999999977 : f32
    %45 = vector.broadcast %cst_21 : f32 to vector<2x32xf32>
    %46 = arith.mulf %45, %42 : vector<2x32xf32>
    %47 = arith.select %44, %42, %46 : vector<2x32xi1>, vector<2x32xf32>
    %48 = vector.extract_strided_slice %5 {offsets = [10, 0], sizes = [2, 32], strides = [1, 1]} : vector<16x32xf32> to vector<2x32xf32>
    %cst_22 = arith.constant dense<0.000000e+00> : vector<2x32xf32>
    %49 = tpu.matmul %47, %6, %cst_22 {dimension_numbers = #tpu.dot_dimension_numbers<[1], [0], [0], [1], [0, 0, 1, 1], [], []>} : vector<2x32xf32>, vector<32x32xf32>, vector<2x32xf32> -> vector<2x32xf32>
    %50 = arith.addf %48, %49 : vector<2x32xf32>
    %cst_23 = arith.constant 0.000000e+00 : f32
    %51 = vector.broadcast %cst_23 : f32 to vector<2x32xf32>
    %52 = arith.cmpf oge, %50, %51 : vector<2x32xf32>
    %cst_24 = arith.constant 0.00999999977 : f32
    %53 = vector.broadcast %cst_24 : f32 to vector<2x32xf32>
    %54 = arith.mulf %53, %50 : vector<2x32xf32>
    %55 = arith.select %52, %50, %54 : vector<2x32xi1>, vector<2x32xf32>
    %56 = vector.extract_strided_slice %5 {offsets = [12, 0], sizes = [2, 32], strides = [1, 1]} : vector<16x32xf32> to vector<2x32xf32>
    %cst_25 = arith.constant dense<0.000000e+00> : vector<2x32xf32>
    %57 = tpu.matmul %55, %6, %cst_25 {dimension_numbers = #tpu.dot_dimension_numbers<[1], [0], [0], [1], [0, 0, 1, 1], [], []>} : vector<2x32xf32>, vector<32x32xf32>, vector<2x32xf32> -> vector<2x32xf32>
    %58 = arith.addf %56, %57 : vector<2x32xf32>
    %cst_26 = arith.constant 0.000000e+00 : f32
    %59 = vector.broadcast %cst_26 : f32 to vector<2x32xf32>
    %60 = arith.cmpf oge, %58, %59 : vector<2x32xf32>
    %cst_27 = arith.constant 0.00999999977 : f32
    %61 = vector.broadcast %cst_27 : f32 to vector<2x32xf32>
    %62 = arith.mulf %61, %58 : vector<2x32xf32>
    %63 = arith.select %60, %58, %62 : vector<2x32xi1>, vector<2x32xf32>
    %64 = vector.extract_strided_slice %5 {offsets = [14, 0], sizes = [2, 32], strides = [1, 1]} : vector<16x32xf32> to vector<2x32xf32>
    %cst_28 = arith.constant dense<0.000000e+00> : vector<2x32xf32>
    %65 = tpu.matmul %63, %6, %cst_28 {dimension_numbers = #tpu.dot_dimension_numbers<[1], [0], [0], [1], [0, 0, 1, 1], [], []>} : vector<2x32xf32>, vector<32x32xf32>, vector<2x32xf32> -> vector<2x32xf32>
    %66 = arith.addf %64, %65 : vector<2x32xf32>
    %cst_29 = arith.constant 0.000000e+00 : f32
    %67 = vector.broadcast %cst_29 : f32 to vector<2x32xf32>
    %68 = arith.cmpf oge, %66, %67 : vector<2x32xf32>
    %cst_30 = arith.constant 0.00999999977 : f32
    %69 = vector.broadcast %cst_30 : f32 to vector<2x32xf32>
    %70 = arith.mulf %69, %66 : vector<2x32xf32>
    %71 = arith.select %68, %66, %70 : vector<2x32xi1>, vector<2x32xf32>
    %c40 = arith.constant 40 : index
    %c0_31 = arith.constant 0 : index
    %72 = vector.load %arg2[%c40, %c0_31] : memref<48x32xf32, #tpu.memory_space<vmem>>, vector<1x32xf32>
    %73 = vector.broadcast %72 : vector<1x32xf32> to vector<2x32xf32>
    %74 = arith.mulf %71, %73 : vector<2x32xf32>
    %cst_32 = arith.constant dense<0.000000e+00> : vector<2xf32>
    %75 = vector.multi_reduction <add>, %74, %cst_32 [1] : vector<2x32xf32> to vector<2xf32>
    %76 = vector.shape_cast %75 : vector<2xf32> to vector<2x1xf32>
    %c0_33 = arith.constant 0 : index
    %77 = memref.load %arg3[%c0_33] : memref<1xf32, #tpu.memory_space<smem>>
    %78 = vector.broadcast %77 : f32 to vector<2x1xf32>
    %79 = arith.addf %76, %78 : vector<2x1xf32>
    %c0_34 = arith.constant 0 : index
    %c0_35 = arith.constant 0 : index
    %80 = vector.load %arg4[%c0_34, %c0_35] : memref<2x1xf32, #tpu.memory_space<vmem>>, vector<2x1xf32>
    tpu.vector_store %arg4[%c0_34, %c0_35], %79 {strides = array<i32>} : memref<2x1xf32, #tpu.memory_space<vmem>>, vector<2x1xf32>,
    return
  }
}

</mosaic_0001>

<llo_original>
// kernel: tpu_custom_call.1
$region0: #{tpu_custom_call.1}
  #allocation0 [shape = 'u32[]', space=smem, size = 0x4, offset = 0x4, fixed_abs, tag = 'smem constant byte address 0x4 - core index']
  #allocation1 [shape = 'u32[144,128]{1,0:T(1,128)}', space=vmem, size = 0x12000, scoped, tag = 'internal scratch']
  #allocation2 [shape = 'f32[1]{0:T(128)S(6)}', space=smem, size = 0x200, scoped, tag = 'scoped memory for tpu_custom_call.1']
  %s0 = inlined_call_operand.vmem [shape: bf16[16,64], index: 0, kind: input, shape index: {}]
  %s1 = inlined_call_operand.vmem [shape: bf16[64,32], index: 1, kind: input, shape index: {}]
  %s2 = inlined_call_operand.vmem [shape: f32[48,32], index: 2, kind: input, shape index: {}]
  %s3 = inlined_call_operand.<no memory space> [shape: f32[1], index: 3, kind: input, shape index: {}]
  %s4 = inlined_call_operand.vmem [shape: f32[2,1], index: 4, kind: output, shape index: {}]
  %s5 = sld [smem:[#allocation0]]
  $region26: #{tpu_custom_call.1} parent=0
    _
  %s7 = ssub.s32 1, %s5
  %s8 = scalar_select 0, %s7, %s5
  %9 = sst [smem:[#allocation2]] %s3
  // Predicated region
  $region2: #{tpu_custom_call.1} parent=0 // pred_check
    _
  $region3: #{tpu_custom_call.1} parent=0 // pred_check_branch
    %11 = sbr.rel (0) target = $region5
  $region4: #{tpu_custom_call.1} parent=0 // pred_region
    _
  $region5: #{tpu_custom_call.1} parent=0 // pred_fallthru
    _
  // Predicated region
  $region6: #{tpu_custom_call.1} parent=0 // pred_check
    _
  $region7: #{tpu_custom_call.1} parent=0 // pred_check_branch
    %13 = sbr.rel (0) target = $region9
  $region8: #{tpu_custom_call.1} parent=0 // pred_region
    _
  $region9: #{tpu_custom_call.1} parent=0 // pred_fallthru
    _
  // Predicated region
  $region10: #{tpu_custom_call.1} parent=0 // pred_check
    _
  $region11: #{tpu_custom_call.1} parent=0 // pred_check_branch
    %15 = sbr.rel (0) target = $region13
  $region12: #{tpu_custom_call.1} parent=0 // pred_region
    _
  $region13: #{tpu_custom_call.1} parent=0 // pred_fallthru
    _
  // Predicated region
  $region14: #{tpu_custom_call.1} parent=0 // pred_check
    _
  $region15: #{tpu_custom_call.1} parent=0 // pred_check_branch
    %17 = sbr.rel (0) target = $region17
  $region16: #{tpu_custom_call.1} parent=0 // pred_region
    _
  $region17: #{tpu_custom_call.1} parent=0 // pred_fallthru
    _
  %v19 = vld [vmem:[%s0] sm:$0xf]
  %v20 = vld [vmem:[%s0 + $0x4] sm:$0xf]
  %v21 = vld [vmem:[%s1] sm:$0xf]
  %v22 = vld [vmem:[%s1 + $0x4] sm:$0xf]
  %v23 = vld [vmem:[%s1 + $0x8] sm:$0xf]
  %v24 = vld [vmem:[%s1 + $0xc] sm:$0xf]
  %v25 = vld [vmem:[%s1 + $0x10] sm:$0xf]
  %v26 = vld [vmem:[%s1 + $0x14] sm:$0xf]
  %v27 = vld [vmem:[%s1 + $0x18] sm:$0xf]
  %v28 = vld [vmem:[%s1 + $0x1c] sm:$0xf]
  %v29 = vld [vmem:[%s2 + $0x20] sm:$0x1]
  %v30 = vlaneseq
  %v31 = vshrl.u32 %v30, 7
  %v32 = vsub.s32 0, %v31
  %v33 = vrot.slane %v29, %v32
  %v36 = vunpack.c.l.b16 %v19
  %v37 = vunpack.c.l.b16 %v20
  %v38 = vpack.c.b16 %v37, %v36
  %v47 = vunpack.c.l.b16 %v21
  %v48 = vunpack.c.l.b16 %v22
  %v49 = vunpack.c.l.b16 %v23
  %v50 = vunpack.c.l.b16 %v24
  %v51 = vunpack.c.l.b16 %v25
  %v52 = vunpack.c.l.b16 %v26
  %v53 = vunpack.c.l.b16 %v27
  %v54 = vunpack.c.l.b16 %v28
  %v55 = vpack.c.b16 %v48, %v47
  %v56 = vpack.c.b16 %v50, %v49
  %v57 = vpack.c.b16 %v52, %v51
  %v58 = vpack.c.b16 %v54, %v53
  %vm63 = vcmask 523264
  %v65 = vsel %vm63, %v38, 0
  %67 = vmatprep.subr.bf16.mxu0 0
  %68 = vmatpush1.bf16.msra.mxu0 %v55
  %69 = vmatprep.subr.bf16.mxu0 0
  %70 = vmatpush1.bf16.msra.mxu0 %v56
  %71 = vmatprep.subr.bf16.mxu0 0
  %72 = vmatpush1.bf16.msra.mxu0 %v57
  %73 = vmatprep.subr.bf16.mxu0 0
  %74 = vmatpush1.bf16.msra.mxu0 %v58
  %75 = vmatprep.subr.bf16.mxu0 0
  %76 = vmatpush1.bf16.msra.mxu0 0
  %77 = vmatprep.subr.bf16.mxu0 0
  %78 = vmatpush1.bf16.msra.mxu0 0
  %79 = vmatprep.subr.bf16.mxu0 0
  %80 = vmatpush1.bf16.msra.mxu0 0
  %81 = vmatprep.subr.bf16.mxu0 0
  %82 = vmatpush1.bf16.msra.mxu0 0
  %83 = vmatprep.subr.bf16.mxu0 0
  %84 = vmatpush1.bf16.msra.mxu0 0
  %85 = vmatprep.subr.bf16.mxu0 0
  %86 = vmatpush1.bf16.msra.mxu0 0
  %87 = vmatprep.subr.bf16.mxu0 0
  %88 = vmatpush1.bf16.msra.mxu0 0
  %89 = vmatprep.subr.bf16.mxu0 0
  %90 = vmatpush1.bf16.msra.mxu0 0
  %91 = vmatprep.subr.bf16.mxu0 0
  %92 = vmatpush1.bf16.msra.mxu0 0
  %93 = vmatprep.subr.bf16.mxu0 0
  %94 = vmatpush1.bf16.msra.mxu0 0
  %95 = vmatprep.subr.bf16.mxu0 0
  %96 = vmatpush1.bf16.msra.mxu0 0
  %97 = vmatprep.subr.bf16.mxu0 0
  %98 = vmatpush1.bf16.msra.mxu0 0
  %99 = vmatprep.mubr.bf16.mxu0 0
  %100 = vmatmul.mubr.bf16.gmra.mrb[0].mxu0 %v65
  %v101 = vpop.f32.mrb[0].mxu0
  %v102 = vadd.f32 %v33, %v101
  %v103 = vpop.f32.mrb[0].mxu0
  %v104 = vpop.f32.mrb[0].mxu0
  %v105 = vadd.f32 %v33, %v104
  %v106 = vpop.f32.mrb[0].mxu0
  %107 = vdwg.mxu0
  %v108 = vld [vmem:[%s2] sm:$0xff]
  %v109 = vld [vmem:[%s2 + $0x8] sm:$0xff]
  %v110 = vld [vmem:[%s2 + $0x10] sm:$0xff]
  %v111 = vld [vmem:[%s2 + $0x18] sm:$0xff]
  %vm112 = vcmask 261120
  %v114 = vsel %vm112, 0.0, 0
  %116 = vmatprep.subr.mxu0 0.0
  %117 = vmatpush1.msra.mxu0 %v108
  %118 = vmatprep.subr.mxu0 0.0
  %119 = vmatpush1.msra.mxu0 %v109
  %120 = vmatprep.subr.mxu0 0.0
  %121 = vmatpush1.msra.mxu0 %v110
  %122 = vmatprep.subr.mxu0 0.0
  %123 = vmatpush1.msra.mxu0 %v111
  %124 = vmatprep.subr.mxu0 0.0
  %125 = vmatpush1.msra.mxu0 0.0
  %126 = vmatprep.subr.mxu0 0.0
  %127 = vmatpush1.msra.mxu0 0.0
  %128 = vmatprep.subr.mxu0 0.0
  %129 = vmatpush1.msra.mxu0 0.0
  %130 = vmatprep.subr.mxu0 0.0
  %131 = vmatpush1.msra.mxu0 0.0
  %132 = vmatprep.subr.mxu0 0.0
  %133 = vmatpush1.msra.mxu0 0.0
  %134 = vmatprep.subr.mxu0 0.0
  %135 = vmatpush1.msra.mxu0 0.0
  %136 = vmatprep.subr.mxu0 0.0
  %137 = vmatpush1.msra.mxu0 0.0
  %138 = vmatprep.subr.mxu0 0.0
  %139 = vmatpush1.msra.mxu0 0.0
  %140 = vmatprep.subr.mxu0 0.0
  %141 = vmatpush1.msra.mxu0 0.0
  %142 = vmatprep.subr.mxu0 0.0
  %143 = vmatpush1.msra.mxu0 0.0
  %144 = vmatprep.subr.mxu0 0.0
  %145 = vmatpush1.msra.mxu0 0.0
  %146 = vmatprep.subr.mxu0 0.0
  %147 = vmatpush1.msra.mxu0 0.0
  %148 = vmatprep.subr.mxu0 0.0
  %149 = vmatpush1.msra.mxu0 0.0
  %150 = vmatprep.subr.mxu0 0.0
  %151 = vmatpush1.msra.mxu0 0.0
  %152 = vmatprep.subr.mxu0 0.0
  %153 = vmatpush1.msra.mxu0 0.0
  %154 = vmatprep.subr.mxu0 0.0
  %155 = vmatpush1.msra.mxu0 0.0
  %156 = vmatprep.subr.mxu0 0.0
  %157 = vmatpush1.msra.mxu0 0.0
  %158 = vmatprep.subr.mxu0 0.0
  %159 = vmatpush1.msra.mxu0 0.0
  %160 = vmatprep.subr.mxu0 0.0
  %161 = vmatpush1.msra.mxu0 0.0
  %162 = vmatprep.subr.mxu0 0.0
  %163 = vmatpush1.msra.mxu0 0.0
  %164 = vmatprep.subr.mxu0 0.0
  %165 = vmatpush1.msra.mxu0 0.0
  %166 = vmatprep.subr.mxu0 0.0
  %167 = vmatpush1.msra.mxu0 0.0
  %168 = vmatprep.subr.mxu0 0.0
  %169 = vmatpush1.msra.mxu0 0.0
  %170 = vmatprep.subr.mxu0 0.0
  %171 = vmatpush1.msra.mxu0 0.0
  %172 = vmatprep.subr.mxu0 0.0
  %173 = vmatpush1.msra.mxu0 0.0
  %174 = vmatprep.subr.mxu0 0.0
  %175 = vmatpush1.msra.mxu0 0.0
  %176 = vmatprep.subr.mxu0 0.0
  %177 = vmatpush1.msra.mxu0 0.0
  %178 = vmatprep.subr.mxu0 0.0
  %179 = vmatpush1.msra.mxu0 0.0
  %180 = vmatprep.mubr.f32.mxu0 0.0
  %181 = vmatmul.mubr.f32.gmra.mrb[0].mxu0 %v114
  %v182 = vpop.f32.mrb[0].mxu0
  %v183 = vadd.f32 0.0, %v182
  %v184 = vpop.f32.mrb[0].mxu0
  %185 = vdwg.mxu0
  %v186 = vadd.f32 %v102, %v183
  %vm187 = vcmp.ge.f32.partialorder %v186, 0.0
  %v188 = vmul.f32 %v186, 0.01
  %v189 = vsel %vm187, %v186, %v188
  %v191 = vsel %vm112, %v189, 0
  %193 = vmatprep.subr.mxu0 0.0
  %194 = vmatpush1.msra.mxu0 %v108
  %195 = vmatprep.subr.mxu0 0.0
  %196 = vmatpush1.msra.mxu0 %v109
  %197 = vmatprep.subr.mxu0 0.0
  %198 = vmatpush1.msra.mxu0 %v110
  %199 = vmatprep.subr.mxu0 0.0
  %200 = vmatpush1.msra.mxu0 %v111
  %201 = vmatprep.subr.mxu0 0.0
  %202 = vmatpush1.msra.mxu0 0.0
  %203 = vmatprep.subr.mxu0 0.0
  %204 = vmatpush1.msra.mxu0 0.0
  %205 = vmatprep.subr.mxu0 0.0
  %206 = vmatpush1.msra.mxu0 0.0
  %207 = vmatprep.subr.mxu0 0.0
  %208 = vmatpush1.msra.mxu0 0.0
  %209 = vmatprep.subr.mxu0 0.0
  %210 = vmatpush1.msra.mxu0 0.0
  %211 = vmatprep.subr.mxu0 0.0
  %212 = vmatpush1.msra.mxu0 0.0
  %213 = vmatprep.subr.mxu0 0.0
  %214 = vmatpush1.msra.mxu0 0.0
  %215 = vmatprep.subr.mxu0 0.0
  %216 = vmatpush1.msra.mxu0 0.0
  %217 = vmatprep.subr.mxu0 0.0
  %218 = vmatpush1.msra.mxu0 0.0
  %219 = vmatprep.subr.mxu0 0.0
  %220 = vmatpush1.msra.mxu0 0.0
  %221 = vmatprep.subr.mxu0 0.0
  %222 = vmatpush1.msra.mxu0 0.0
  %223 = vmatprep.subr.mxu0 0.0
  %224 = vmatpush1.msra.mxu0 0.0
  %225 = vmatprep.subr.mxu0 0.0
  %226 = vmatpush1.msra.mxu0 0.0
  %227 = vmatprep.subr.mxu0 0.0
  %228 = vmatpush1.msra.mxu0 0.0
  %229 = vmatprep.subr.mxu0 0.0
  %230 = vmatpush1.msra.mxu0 0.0
  %231 = vmatprep.subr.mxu0 0.0
  %232 = vmatpush1.msra.mxu0 0.0
  %233 = vmatprep.subr.mxu0 0.0
  %234 = vmatpush1.msra.mxu0 0.0
  %235 = vmatprep.subr.mxu0 0.0
  %236 = vmatpush1.msra.mxu0 0.0
  %237 = vmatprep.subr.mxu0 0.0
  %238 = vmatpush1.msra.mxu0 0.0
  %239 = vmatprep.subr.mxu0 0.0
  %240 = vmatpush1.msra.mxu0 0.0
  %241 = vmatprep.subr.mxu0 0.0
  %242 = vmatpush1.msra.mxu0 0.0
  %243 = vmatprep.subr.mxu0 0.0
  %244 = vmatpush1.msra.mxu0 0.0
  %245 = vmatprep.subr.mxu0 0.0
  %246 = vmatpush1.msra.mxu0 0.0
  %247 = vmatprep.subr.mxu0 0.0
  %248 = vmatpush1.msra.mxu0 0.0
  %249 = vmatprep.subr.mxu0 0.0
  %250 = vmatpush1.msra.mxu0 0.0
  %251 = vmatprep.subr.mxu0 0.0
  %252 = vmatpush1.msra.mxu0 0.0
  %253 = vmatprep.subr.mxu0 0.0
  %254 = vmatpush1.msra.mxu0 0.0
  %255 = vmatprep.subr.mxu0 0.0
  %256 = vmatpush1.msra.mxu0 0.0
  %257 = vmatprep.mubr.f32.mxu0 0.0
  %258 = vmatmul.mubr.f32.gmra.mrb[0].mxu0 %v191
  %v259 = vpop.f32.mrb[0].mxu0
  %v260 = vadd.f32 0.0, %v259
  %v261 = vpop.f32.mrb[0].mxu0
  %262 = vdwg.mxu0
  %v264 = vrot.slane %v260, 6
  %v266 = vadd.f32 %v102, %v264
  %vm267 = vcmp.ge.f32.partialorder %v266, 0.0
  %v268 = vmul.f32 %v266, 0.01
  %v269 = vsel %vm267, %v266, %v268
  %v271 = vrot.slane %v269, 2
  %v272 = vsel %vm112, %v271, 0
  %274 = vmatprep.subr.mxu0 0.0
  %275 = vmatpush1.msra.mxu0 %v108
  %276 = vmatprep.subr.mxu0 0.0
  %277 = vmatpush1.msra.mxu0 %v109
  %278 = vmatprep.subr.mxu0 0.0
  %279 = vmatpush1.msra.mxu0 %v110
  %280 = vmatprep.subr.mxu0 0.0
  %281 = vmatpush1.msra.mxu0 %v111
  %282 = vmatprep.subr.mxu0 0.0
  %283 = vmatpush1.msra.mxu0 0.0
  %284 = vmatprep.subr.mxu0 0.0
  %285 = vmatpush1.msra.mxu0 0.0
  %286 = vmatprep.subr.mxu0 0.0
  %287 = vmatpush1.msra.mxu0 0.0
  %288 = vmatprep.subr.mxu0 0.0
  %289 = vmatpush1.msra.mxu0 0.0
  %290 = vmatprep.subr.mxu0 0.0
  %291 = vmatpush1.msra.mxu0 0.0
  %292 = vmatprep.subr.mxu0 0.0
  %293 = vmatpush1.msra.mxu0 0.0
  %294 = vmatprep.subr.mxu0 0.0
  %295 = vmatpush1.msra.mxu0 0.0
  %296 = vmatprep.subr.mxu0 0.0
  %297 = vmatpush1.msra.mxu0 0.0
  %298 = vmatprep.subr.mxu0 0.0
  %299 = vmatpush1.msra.mxu0 0.0
  %300 = vmatprep.subr.mxu0 0.0
  %301 = vmatpush1.msra.mxu0 0.0
  %302 = vmatprep.subr.mxu0 0.0
  %303 = vmatpush1.msra.mxu0 0.0
  %304 = vmatprep.subr.mxu0 0.0
  %305 = vmatpush1.msra.mxu0 0.0
  %306 = vmatprep.subr.mxu0 0.0
  %307 = vmatpush1.msra.mxu0 0.0
  %308 = vmatprep.subr.mxu0 0.0
  %309 = vmatpush1.msra.mxu0 0.0
  %310 = vmatprep.subr.mxu0 0.0
  %311 = vmatpush1.msra.mxu0 0.0
  %312 = vmatprep.subr.mxu0 0.0
  %313 = vmatpush1.msra.mxu0 0.0
  %314 = vmatprep.subr.mxu0 0.0
  %315 = vmatpush1.msra.mxu0 0.0
  %316 = vmatprep.subr.mxu0 0.0
  %317 = vmatpush1.msra.mxu0 0.0
  %318 = vmatprep.subr.mxu0 0.0
  %319 = vmatpush1.msra.mxu0 0.0
  %320 = vmatprep.subr.mxu0 0.0
  %321 = vmatpush1.msra.mxu0 0.0
  %322 = vmatprep.subr.mxu0 0.0
  %323 = vmatpush1.msra.mxu0 0.0
  %324 = vmatprep.subr.mxu0 0.0
  %325 = vmatpush1.msra.mxu0 0.0
  %326 = vmatprep.subr.mxu0 0.0
  %327 = vmatpush1.msra.mxu0 0.0
  %328 = vmatprep.subr.mxu0 0.0
  %329 = vmatpush1.msra.mxu0 0.0
  %330 = vmatprep.subr.mxu0 0.0
  %331 = vmatpush1.msra.mxu0 0.0
  %332 = vmatprep.subr.mxu0 0.0
  %333 = vmatpush1.msra.mxu0 0.0
  %334 = vmatprep.subr.mxu0 0.0
  %335 = vmatpush1.msra.mxu0 0.0
  %336 = vmatprep.subr.mxu0 0.0
  %337 = vmatpush1.msra.mxu0 0.0
  %338 = vmatprep.mubr.f32.mxu0 0.0
  %339 = vmatmul.mubr.f32.gmra.mrb[0].mxu0 %v272
  %v340 = vpop.f32.mrb[0].mxu0
  %v341 = vadd.f32 0.0, %v340
  %v342 = vpop.f32.mrb[0].mxu0
  %343 = vdwg.mxu0
  %v345 = vrot.slane %v341, 4
  %v347 = vadd.f32 %v102, %v345
  %vm348 = vcmp.ge.f32.partialorder %v347, 0.0
  %v349 = vmul.f32 %v347, 0.01
  %v350 = vsel %vm348, %v347, %v349
  %v352 = vrot.slane %v350, 4
  %v353 = vsel %vm112, %v352, 0
  %355 = vmatprep.subr.mxu0 0.0
  %356 = vmatpush1.msra.mxu0 %v108
  %357 = vmatprep.subr.mxu0 0.0
  %358 = vmatpush1.msra.mxu0 %v109
  %359 = vmatprep.subr.mxu0 0.0
  %360 = vmatpush1.msra.mxu0 %v110
  %361 = vmatprep.subr.mxu0 0.0
  %362 = vmatpush1.msra.mxu0 %v111
  %363 = vmatprep.subr.mxu0 0.0
  %364 = vmatpush1.msra.mxu0 0.0
  %365 = vmatprep.subr.mxu0 0.0
  %366 = vmatpush1.msra.mxu0 0.0
  %367 = vmatprep.subr.mxu0 0.0
  %368 = vmatpush1.msra.mxu0 0.0
  %369 = vmatprep.subr.mxu0 0.0
  %370 = vmatpush1.msra.mxu0 0.0
  %371 = vmatprep.subr.mxu0 0.0
  %372 = vmatpush1.msra.mxu0 0.0
  %373 = vmatprep.subr.mxu0 0.0
  %374 = vmatpush1.msra.mxu0 0.0
  %375 = vmatprep.subr.mxu0 0.0
  %376 = vmatpush1.msra.mxu0 0.0
  %377 = vmatprep.subr.mxu0 0.0
  %378 = vmatpush1.msra.mxu0 0.0
  %379 = vmatprep.subr.mxu0 0.0
  %380 = vmatpush1.msra.mxu0 0.0
  %381 = vmatprep.subr.mxu0 0.0
  %382 = vmatpush1.msra.mxu0 0.0
  %383 = vmatprep.subr.mxu0 0.0
  %384 = vmatpush1.msra.mxu0 0.0
  %385 = vmatprep.subr.mxu0 0.0
  %386 = vmatpush1.msra.mxu0 0.0
  %387 = vmatprep.subr.mxu0 0.0
  %388 = vmatpush1.msra.mxu0 0.0
  %389 = vmatprep.subr.mxu0 0.0
  %390 = vmatpush1.msra.mxu0 0.0
  %391 = vmatprep.subr.mxu0 0.0
  %392 = vmatpush1.msra.mxu0 0.0
  %393 = vmatprep.subr.mxu0 0.0
  %394 = vmatpush1.msra.mxu0 0.0
  %395 = vmatprep.subr.mxu0 0.0
  %396 = vmatpush1.msra.mxu0 0.0
  %397 = vmatprep.subr.mxu0 0.0
  %398 = vmatpush1.msra.mxu0 0.0
  %399 = vmatprep.subr.mxu0 0.0
  %400 = vmatpush1.msra.mxu0 0.0
  %401 = vmatprep.subr.mxu0 0.0
  %402 = vmatpush1.msra.mxu0 0.0
  %403 = vmatprep.subr.mxu0 0.0
  %404 = vmatpush1.msra.mxu0 0.0
  %405 = vmatprep.subr.mxu0 0.0
  %406 = vmatpush1.msra.mxu0 0.0
  %407 = vmatprep.subr.mxu0 0.0
  %408 = vmatpush1.msra.mxu0 0.0
  %409 = vmatprep.subr.mxu0 0.0
  %410 = vmatpush1.msra.mxu0 0.0
  %411 = vmatprep.subr.mxu0 0.0
  %412 = vmatpush1.msra.mxu0 0.0
  %413 = vmatprep.subr.mxu0 0.0
  %414 = vmatpush1.msra.mxu0 0.0
  %415 = vmatprep.subr.mxu0 0.0
  %416 = vmatpush1.msra.mxu0 0.0
  %417 = vmatprep.subr.mxu0 0.0
  %418 = vmatpush1.msra.mxu0 0.0
  %419 = vmatprep.mubr.f32.mxu0 0.0
  %420 = vmatmul.mubr.f32.gmra.mrb[0].mxu0 %v353
  %v421 = vpop.f32.mrb[0].mxu0
  %v422 = vadd.f32 0.0, %v421
  %v423 = vpop.f32.mrb[0].mxu0
  %424 = vdwg.mxu0
  %v426 = vrot.slane %v422, 2
  %v428 = vadd.f32 %v102, %v426
  %vm429 = vcmp.ge.f32.partialorder %v428, 0.0
  %v430 = vmul.f32 %v428, 0.01
  %v431 = vsel %vm429, %v428, %v430
  %v433 = vrot.slane %v431, 6
  %v434 = vsel %vm112, %v433, 0
  %436 = vmatprep.subr.mxu0 0.0
  %437 = vmatpush1.msra.mxu0 %v108
  %438 = vmatprep.subr.mxu0 0.0
  %439 = vmatpush1.msra.mxu0 %v109
  %440 = vmatprep.subr.mxu0 0.0
  %441 = vmatpush1.msra.mxu0 %v110
  %442 = vmatprep.subr.mxu0 0.0
  %443 = vmatpush1.msra.mxu0 %v111
  %444 = vmatprep.subr.mxu0 0.0
  %445 = vmatpush1.msra.mxu0 0.0
  %446 = vmatprep.subr.mxu0 0.0
  %447 = vmatpush1.msra.mxu0 0.0
  %448 = vmatprep.subr.mxu0 0.0
  %449 = vmatpush1.msra.mxu0 0.0
  %450 = vmatprep.subr.mxu0 0.0
  %451 = vmatpush1.msra.mxu0 0.0
  %452 = vmatprep.subr.mxu0 0.0
  %453 = vmatpush1.msra.mxu0 0.0
  %454 = vmatprep.subr.mxu0 0.0
  %455 = vmatpush1.msra.mxu0 0.0
  %456 = vmatprep.subr.mxu0 0.0
  %457 = vmatpush1.msra.mxu0 0.0
  %458 = vmatprep.subr.mxu0 0.0
  %459 = vmatpush1.msra.mxu0 0.0
  %460 = vmatprep.subr.mxu0 0.0
  %461 = vmatpush1.msra.mxu0 0.0
  %462 = vmatprep.subr.mxu0 0.0
  %463 = vmatpush1.msra.mxu0 0.0
  %464 = vmatprep.subr.mxu0 0.0
  %465 = vmatpush1.msra.mxu0 0.0
  %466 = vmatprep.subr.mxu0 0.0
  %467 = vmatpush1.msra.mxu0 0.0
  %468 = vmatprep.subr.mxu0 0.0
  %469 = vmatpush1.msra.mxu0 0.0
  %470 = vmatprep.subr.mxu0 0.0
  %471 = vmatpush1.msra.mxu0 0.0
  %472 = vmatprep.subr.mxu0 0.0
  %473 = vmatpush1.msra.mxu0 0.0
  %474 = vmatprep.subr.mxu0 0.0
  %475 = vmatpush1.msra.mxu0 0.0
  %476 = vmatprep.subr.mxu0 0.0
  %477 = vmatpush1.msra.mxu0 0.0
  %478 = vmatprep.subr.mxu0 0.0
  %479 = vmatpush1.msra.mxu0 0.0
  %480 = vmatprep.subr.mxu0 0.0
  %481 = vmatpush1.msra.mxu0 0.0
  %482 = vmatprep.subr.mxu0 0.0
  %483 = vmatpush1.msra.mxu0 0.0
  %484 = vmatprep.subr.mxu0 0.0
  %485 = vmatpush1.msra.mxu0 0.0
  %486 = vmatprep.subr.mxu0 0.0
  %487 = vmatpush1.msra.mxu0 0.0
  %488 = vmatprep.subr.mxu0 0.0
  %489 = vmatpush1.msra.mxu0 0.0
  %490 = vmatprep.subr.mxu0 0.0
  %491 = vmatpush1.msra.mxu0 0.0
  %492 = vmatprep.subr.mxu0 0.0
  %493 = vmatpush1.msra.mxu0 0.0
  %494 = vmatprep.subr.mxu0 0.0
  %495 = vmatpush1.msra.mxu0 0.0
  %496 = vmatprep.subr.mxu0 0.0
  %497 = vmatpush1.msra.mxu0 0.0
  %498 = vmatprep.subr.mxu0 0.0
  %499 = vmatpush1.msra.mxu0 0.0
  %500 = vmatprep.mubr.f32.mxu0 0.0
  %501 = vmatmul.mubr.f32.gmra.mrb[0].mxu0 %v434
  %v502 = vpop.f32.mrb[0].mxu0
  %v503 = vadd.f32 0.0, %v502
  %v504 = vpop.f32.mrb[0].mxu0
  %505 = vdwg.mxu0
  %v506 = vadd.f32 %v105, %v503
  %vm507 = vcmp.ge.f32.partialorder %v506, 0.0
  %v508 = vmul.f32 %v506, 0.01
  %v509 = vsel %vm507, %v506, %v508
  %v511 = vsel %vm112, %v509, 0
  %513 = vmatprep.subr.mxu0 0.0
  %514 = vmatpush1.msra.mxu0 %v108
  %515 = vmatprep.subr.mxu0 0.0
  %516 = vmatpush1.msra.mxu0 %v109
  %517 = vmatprep.subr.mxu0 0.0
  %518 = vmatpush1.msra.mxu0 %v110
  %519 = vmatprep.subr.mxu0 0.0
  %520 = vmatpush1.msra.mxu0 %v111
  %521 = vmatprep.subr.mxu0 0.0
  %522 = vmatpush1.msra.mxu0 0.0
  %523 = vmatprep.subr.mxu0 0.0
  %524 = vmatpush1.msra.mxu0 0.0
  %525 = vmatprep.subr.mxu0 0.0
  %526 = vmatpush1.msra.mxu0 0.0
  %527 = vmatprep.subr.mxu0 0.0
  %528 = vmatpush1.msra.mxu0 0.0
  %529 = vmatprep.subr.mxu0 0.0
  %530 = vmatpush1.msra.mxu0 0.0
  %531 = vmatprep.subr.mxu0 0.0
  %532 = vmatpush1.msra.mxu0 0.0
  %533 = vmatprep.subr.mxu0 0.0
  %534 = vmatpush1.msra.mxu0 0.0
  %535 = vmatprep.subr.mxu0 0.0
  %536 = vmatpush1.msra.mxu0 0.0
  %537 = vmatprep.subr.mxu0 0.0
  %538 = vmatpush1.msra.mxu0 0.0
  %539 = vmatprep.subr.mxu0 0.0
  %540 = vmatpush1.msra.mxu0 0.0
  %541 = vmatprep.subr.mxu0 0.0
  %542 = vmatpush1.msra.mxu0 0.0
  %543 = vmatprep.subr.mxu0 0.0
  %544 = vmatpush1.msra.mxu0 0.0
  %545 = vmatprep.subr.mxu0 0.0
  %546 = vmatpush1.msra.mxu0 0.0
  %547 = vmatprep.subr.mxu0 0.0
  %548 = vmatpush1.msra.mxu0 0.0
  %549 = vmatprep.subr.mxu0 0.0
  %550 = vmatpush1.msra.mxu0 0.0
  %551 = vmatprep.subr.mxu0 0.0
  %552 = vmatpush1.msra.mxu0 0.0
  %553 = vmatprep.subr.mxu0 0.0
  %554 = vmatpush1.msra.mxu0 0.0
  %555 = vmatprep.subr.mxu0 0.0
  %556 = vmatpush1.msra.mxu0 0.0
  %557 = vmatprep.subr.mxu0 0.0
  %558 = vmatpush1.msra.mxu0 0.0
  %559 = vmatprep.subr.mxu0 0.0
  %560 = vmatpush1.msra.mxu0 0.0
  %561 = vmatprep.subr.mxu0 0.0
  %562 = vmatpush1.msra.mxu0 0.0
  %563 = vmatprep.subr.mxu0 0.0
  %564 = vmatpush1.msra.mxu0 0.0
  %565 = vmatprep.subr.mxu0 0.0
  %566 = vmatpush1.msra.mxu0 0.0
  %567 = vmatprep.subr.mxu0 0.0
  %568 = vmatpush1.msra.mxu0 0.0
  %569 = vmatprep.subr.mxu0 0.0
  %570 = vmatpush1.msra.mxu0 0.0
  %571 = vmatprep.subr.mxu0 0.0
  %572 = vmatpush1.msra.mxu0 0.0
  %573 = vmatprep.subr.mxu0 0.0
  %574 = vmatpush1.msra.mxu0 0.0
  %575 = vmatprep.subr.mxu0 0.0
  %576 = vmatpush1.msra.mxu0 0.0
  %577 = vmatprep.mubr.f32.mxu0 0.0
  %578 = vmatmul.mubr.f32.gmra.mrb[0].mxu0 %v511
  %v579 = vpop.f32.mrb[0].mxu0
  %v580 = vadd.f32 0.0, %v579
  %v581 = vpop.f32.mrb[0].mxu0
  %582 = vdwg.mxu0
  %v584 = vrot.slane %v580, 6
  %v586 = vadd.f32 %v105, %v584
  %vm587 = vcmp.ge.f32.partialorder %v586, 0.0
  %v588 = vmul.f32 %v586, 0.01
  %v589 = vsel %vm587, %v586, %v588
  %v591 = vrot.slane %v589, 2
  %v592 = vsel %vm112, %v591, 0
  %594 = vmatprep.subr.mxu0 0.0
  %595 = vmatpush1.msra.mxu0 %v108
  %596 = vmatprep.subr.mxu0 0.0
  %597 = vmatpush1.msra.mxu0 %v109
  %598 = vmatprep.subr.mxu0 0.0
  %599 = vmatpush1.msra.mxu0 %v110
  %600 = vmatprep.subr.mxu0 0.0
  %601 = vmatpush1.msra.mxu0 %v111
  %602 = vmatprep.subr.mxu0 0.0
  %603 = vmatpush1.msra.mxu0 0.0
  %604 = vmatprep.subr.mxu0 0.0
  %605 = vmatpush1.msra.mxu0 0.0
  %606 = vmatprep.subr.mxu0 0.0
  %607 = vmatpush1.msra.mxu0 0.0
  %608 = vmatprep.subr.mxu0 0.0
  %609 = vmatpush1.msra.mxu0 0.0
  %610 = vmatprep.subr.mxu0 0.0
  %611 = vmatpush1.msra.mxu0 0.0
  %612 = vmatprep.subr.mxu0 0.0
  %613 = vmatpush1.msra.mxu0 0.0
  %614 = vmatprep.subr.mxu0 0.0
  %615 = vmatpush1.msra.mxu0 0.0
  %616 = vmatprep.subr.mxu0 0.0
  %617 = vmatpush1.msra.mxu0 0.0
  %618 = vmatprep.subr.mxu0 0.0
  %619 = vmatpush1.msra.mxu0 0.0
  %620 = vmatprep.subr.mxu0 0.0
  %621 = vmatpush1.msra.mxu0 0.0
  %622 = vmatprep.subr.mxu0 0.0
  %623 = vmatpush1.msra.mxu0 0.0
  %624 = vmatprep.subr.mxu0 0.0
  %625 = vmatpush1.msra.mxu0 0.0
  %626 = vmatprep.subr.mxu0 0.0
  %627 = vmatpush1.msra.mxu0 0.0
  %628 = vmatprep.subr.mxu0 0.0
  %629 = vmatpush1.msra.mxu0 0.0
  %630 = vmatprep.subr.mxu0 0.0
  %631 = vmatpush1.msra.mxu0 0.0
  %632 = vmatprep.subr.mxu0 0.0
  %633 = vmatpush1.msra.mxu0 0.0
  %634 = vmatprep.subr.mxu0 0.0
  %635 = vmatpush1.msra.mxu0 0.0
  %636 = vmatprep.subr.mxu0 0.0
  %637 = vmatpush1.msra.mxu0 0.0
  %638 = vmatprep.subr.mxu0 0.0
  %639 = vmatpush1.msra.mxu0 0.0
  %640 = vmatprep.subr.mxu0 0.0
  %641 = vmatpush1.msra.mxu0 0.0
  %642 = vmatprep.subr.mxu0 0.0
  %643 = vmatpush1.msra.mxu0 0.0
  %644 = vmatprep.subr.mxu0 0.0
  %645 = vmatpush1.msra.mxu0 0.0
  %646 = vmatprep.subr.mxu0 0.0
  %647 = vmatpush1.msra.mxu0 0.0
  %648 = vmatprep.subr.mxu0 0.0
  %649 = vmatpush1.msra.mxu0 0.0
  %650 = vmatprep.subr.mxu0 0.0
  %651 = vmatpush1.msra.mxu0 0.0
  %652 = vmatprep.subr.mxu0 0.0
  %653 = vmatpush1.msra.mxu0 0.0
  %654 = vmatprep.subr.mxu0 0.0
  %655 = vmatpush1.msra.mxu0 0.0
  %656 = vmatprep.subr.mxu0 0.0
  %657 = vmatpush1.msra.mxu0 0.0
  %658 = vmatprep.mubr.f32.mxu0 0.0
  %659 = vmatmul.mubr.f32.gmra.mrb[0].mxu0 %v592
  %v660 = vpop.f32.mrb[0].mxu0
  %v661 = vadd.f32 0.0, %v660
  %v662 = vpop.f32.mrb[0].mxu0
  %663 = vdwg.mxu0
  %v665 = vrot.slane %v661, 4
  %v667 = vadd.f32 %v105, %v665
  %vm668 = vcmp.ge.f32.partialorder %v667, 0.0
  %v669 = vmul.f32 %v667, 0.01
  %v670 = vsel %vm668, %v667, %v669
  %v672 = vrot.slane %v670, 4
  %v673 = vsel %vm112, %v672, 0
  %675 = vmatprep.subr.mxu0 0.0
  %676 = vmatpush1.msra.mxu0 %v108
  %677 = vmatprep.subr.mxu0 0.0
  %678 = vmatpush1.msra.mxu0 %v109
  %679 = vmatprep.subr.mxu0 0.0
  %680 = vmatpush1.msra.mxu0 %v110
  %681 = vmatprep.subr.mxu0 0.0
  %682 = vmatpush1.msra.mxu0 %v111
  %683 = vmatprep.subr.mxu0 0.0
  %684 = vmatpush1.msra.mxu0 0.0
  %685 = vmatprep.subr.mxu0 0.0
  %686 = vmatpush1.msra.mxu0 0.0
  %687 = vmatprep.subr.mxu0 0.0
  %688 = vmatpush1.msra.mxu0 0.0
  %689 = vmatprep.subr.mxu0 0.0
  %690 = vmatpush1.msra.mxu0 0.0
  %691 = vmatprep.subr.mxu0 0.0
  %692 = vmatpush1.msra.mxu0 0.0
  %693 = vmatprep.subr.mxu0 0.0
  %694 = vmatpush1.msra.mxu0 0.0
  %695 = vmatprep.subr.mxu0 0.0
  %696 = vmatpush1.msra.mxu0 0.0
  %697 = vmatprep.subr.mxu0 0.0
  %698 = vmatpush1.msra.mxu0 0.0
  %699 = vmatprep.subr.mxu0 0.0
  %700 = vmatpush1.msra.mxu0 0.0
  %701 = vmatprep.subr.mxu0 0.0
  %702 = vmatpush1.msra.mxu0 0.0
  %703 = vmatprep.subr.mxu0 0.0
  %704 = vmatpush1.msra.mxu0 0.0
  %705 = vmatprep.subr.mxu0 0.0
  %706 = vmatpush1.msra.mxu0 0.0
  %707 = vmatprep.subr.mxu0 0.0
  %708 = vmatpush1.msra.mxu0 0.0
  %709 = vmatprep.subr.mxu0 0.0
  %710 = vmatpush1.msra.mxu0 0.0
  %711 = vmatprep.subr.mxu0 0.0
  %712 = vmatpush1.msra.mxu0 0.0
  %713 = vmatprep.subr.mxu0 0.0
  %714 = vmatpush1.msra.mxu0 0.0
  %715 = vmatprep.subr.mxu0 0.0
  %716 = vmatpush1.msra.mxu0 0.0
  %717 = vmatprep.subr.mxu0 0.0
  %718 = vmatpush1.msra.mxu0 0.0
  %719 = vmatprep.subr.mxu0 0.0
  %720 = vmatpush1.msra.mxu0 0.0
  %721 = vmatprep.subr.mxu0 0.0
  %722 = vmatpush1.msra.mxu0 0.0
  %723 = vmatprep.subr.mxu0 0.0
  %724 = vmatpush1.msra.mxu0 0.0
  %725 = vmatprep.subr.mxu0 0.0
  %726 = vmatpush1.msra.mxu0 0.0
  %727 = vmatprep.subr.mxu0 0.0
  %728 = vmatpush1.msra.mxu0 0.0
  %729 = vmatprep.subr.mxu0 0.0
  %730 = vmatpush1.msra.mxu0 0.0
  %731 = vmatprep.subr.mxu0 0.0
  %732 = vmatpush1.msra.mxu0 0.0
  %733 = vmatprep.subr.mxu0 0.0
  %734 = vmatpush1.msra.mxu0 0.0
  %735 = vmatprep.subr.mxu0 0.0
  %736 = vmatpush1.msra.mxu0 0.0
  %737 = vmatprep.subr.mxu0 0.0
  %738 = vmatpush1.msra.mxu0 0.0
  %739 = vmatprep.mubr.f32.mxu0 0.0
  %740 = vmatmul.mubr.f32.gmra.mrb[0].mxu0 %v673
  %v741 = vpop.f32.mrb[0].mxu0
  %v742 = vadd.f32 0.0, %v741
  %v743 = vpop.f32.mrb[0].mxu0
  %744 = vdwg.mxu0
  %v746 = vrot.slane %v742, 2
  %v748 = vadd.f32 %v105, %v746
  %vm749 = vcmp.ge.f32.partialorder %v748, 0.0
  %v750 = vmul.f32 %v748, 0.01
  %v751 = vsel %vm749, %v748, %v750
  %v752 = vld [vmem:[%s2 + $0x28] sm:$0x1]
  %v753 = vlaneseq
  %v754 = vshrl.u32 %v753, 7
  %v755 = vsub.s32 0, %v754
  %v756 = vrot.slane %v752, %v755
  %v757 = vmul.f32 %v751, %v756
  %vm758 = vcmask 261126
  %v759 = vsel %vm758, %v757, 0.0
  %760 = vadd.xlane.f32.xlu0 %v759
  %v761 = vpop.xlane.xlu0 %760
  %s762 = sld [smem:[#allocation2]]
  %v763 = vstv %s762
  %v764 = vadd.f32 %v761, %v763
  %vm765 = vcmask 7174
  %766 = vst.msk [vmem:[%s4 - $0x6] sm:$0xc0] %vm765, %v764
  // Predicated region
  $region18: #{tpu_custom_call.1} parent=0 // pred_check
    _
  $region19: #{tpu_custom_call.1} parent=0 // pred_check_branch
    %768 = sbr.rel (0) target = $region21
  $region20: #{tpu_custom_call.1} parent=0 // pred_region
    _
  $region21: #{tpu_custom_call.1} parent=0 // pred_fallthru
    _
  // Predicated region
  $region22: #{tpu_custom_call.1} parent=0 // pred_check
    _
  $region23: #{tpu_custom_call.1} parent=0 // pred_check_branch
    %770 = sbr.rel (0) target = $region25
  $region24: #{tpu_custom_call.1} parent=0 // pred_region
    _
  $region25: #{tpu_custom_call.1} parent=0 // pred_fallthru
    _

</llo_original>
